<compile_context>
chip_gen: v5e
topology: v5e:2x2
jax: 0.10.0
libtpu: 0.0.40
codegen_flags: <defaults>
</compile_context>

<pallas_src>
import jax
import jax.numpy as jnp
from jax.experimental import pallas as pl
from jax.experimental.pallas import tpu as pltpu


def _round_up(x, m):
    return ((x + m - 1) // m) * m


def _simple_model_kernel(x_ref, wc_ref, small_ref, bl_ref, o_ref):
    # x_ref:     (TILE_N, 300)  VMEM  flattened NCHW input tile
    # wc_ref:    (300, 8)       VMEM  conv weight, flattened (C,H,W) per out-channel
    # small_ref: (2, 8)         VMEM  row 0 = conv bias, row 1 = linear weight
    # bl_ref:    (1,)           SMEM  linear bias (scalar)
    # o_ref:     (1, 1, TILE_N) VMEM  lane-dense output block
    x = x_ref[...]
    bc = small_ref[0:1, :]                                  # (1, 8) conv bias
    wl = small_ref[1:2, :]                                  # (1, 8) linear weight

    # Conv2d with full-extent kernel == matmul + bias (MXU), then ReLU (VPU).
    h = jnp.maximum(
        jnp.dot(x, wc_ref[...], preferred_element_type=jnp.float32) + bc,
        0.0,
    )                                                       # (TILE_N, 8)

    # Dropout (eval mode) -> identity.

    # Linear(8 -> 1) as an 8-wide lane reduce on the VPU/XLU (MXU matmul would be
    # <1% utilized and would serialize an extra MXU push/pop per tile).
    lin = jnp.sum(h * wl, axis=-1) + bl_ref[0]              # (TILE_N,)

    # Sigmoid; reciprocal of the denominator rides the EUP slot (approx).
    sig = pl.reciprocal(1.0 + jnp.exp(-lin), approx=True)
    o_ref[...] = sig.reshape(1, 1, -1)


def simple_model_forward(x_nchw, conv_w, conv_b, lin_w, lin_b, *, tile_n=1024):
    """x_nchw: (N, 3, 10, 10) float32. Returns (N, 1) float32."""
    n = x_nchw.shape[0]
    # TILE_N: multiple of 8 (f32 sublane); clamp to the (8-padded) batch so tiny
    # batches don't DMA a huge mostly-padded tile.
    tile_n = min(tile_n, _round_up(n, 8))
    n_pad = _round_up(n, tile_n)
    grid_n = n_pad // tile_n

    # Flatten input the same way the conv contraction would: (C, H, W) -> 300.
    # This reshape is contiguous (no data movement in the wrapper).
    x_flat = x_nchw.reshape(n, -1).astype(jnp.float32)      # (N, 300)
    if n_pad != n:
        x_flat = jnp.pad(x_flat, ((0, n_pad - n), (0, 0)))  # (N_pad, 300)
    wc = conv_w.reshape(conv_w.shape[0], -1).T              # (300, 8)
    # Pack conv bias + linear weight into a single small VMEM-resident tile.
    small = jnp.concatenate(
        [conv_b.reshape(1, -1), lin_w.reshape(1, -1)], axis=0
    ).astype(jnp.float32)                                   # (2, 8)
    bl = lin_b.reshape(-1).astype(jnp.float32)              # (1,)

    out = pl.pallas_call(
        _simple_model_kernel,
        out_shape=jax.ShapeDtypeStruct((grid_n, 1, tile_n), jnp.float32),
        grid=(grid_n,),
        in_specs=[
            # Batch-tiled input: pipelined (double-buffered) HBM->VMEM DMA per step.
            pl.BlockSpec((tile_n, x_flat.shape[1]), lambda i: (i, 0)),
            # Weights/biases: constant block index -> fetched once, VMEM-resident.
            pl.BlockSpec(wc.shape, lambda i: (0, 0)),
            pl.BlockSpec(small.shape, lambda i: (0, 0)),
            # Scalar linear bias lives in SMEM (no (8,128) VMEM tile wasted).
            pl.BlockSpec(memory_space=pltpu.MemorySpace.SMEM),
        ],
        out_specs=pl.BlockSpec((1, 1, tile_n), lambda i: (i, 0, 0)),
        compiler_params=pltpu.CompilerParams(
            dimension_semantics=("parallel",),
        ),
    )(x_flat, wc, small, bl)

    # Lane-dense (grid_n, 1, tile_n) -> (n_pad, 1) -> drop batch padding.
    return out.reshape(-1, 1)[:n]


def init_params(key):
    """Deterministic PyTorch-style (Kaiming-uniform-ish) initialization."""
    k_conv_w, k_conv_b, k_lin_w, k_lin_b = jax.random.split(key, 4)
    # Conv2d(3, 8, kernel_size=10): weight (8, 3, 10, 10), bias (8,)
    fan_in_conv = 3 * 10 * 10
    bound_c = 1.0 / (fan_in_conv ** 0.5)
    conv_w = jax.random.uniform(k_conv_w, (8, 3, 10, 10), jnp.float32,
                                minval=-bound_c, maxval=bound_c)
    conv_b = jax.random.uniform(k_conv_b, (8,), jnp.float32,
                                minval=-bound_c, maxval=bound_c)
    # Linear(8, 1): weight (1, 8), bias (1,)
    fan_in_lin = 8
    bound_l = 1.0 / (fan_in_lin ** 0.5)
    lin_w = jax.random.uniform(k_lin_w, (1, 8), jnp.float32,
                               minval=-bound_l, maxval=bound_l)
    lin_b = jax.random.uniform(k_lin_b, (1,), jnp.float32,
                               minval=-bound_l, maxval=bound_l)
    return conv_w, conv_b, lin_w, lin_b


if __name__ == "__main__":
    key = jax.random.PRNGKey(0)
    k_params, k_x = jax.random.split(key)
    conv_w, conv_b, lin_w, lin_b = init_params(k_params)

    # Input must be (N, 3, 10, 10) so the conv output is (N, 8, 1, 1) and the
    # flattened feature width is 8 (matching nn.Linear(8, 1)).
    x = jax.random.normal(k_x, (2, 3, 10, 10), jnp.float32)

    out = jax.block_until_ready(
        simple_model_forward(x, conv_w, conv_b, lin_w, lin_b))

    # Reference in plain JAX (same math: full-extent conv == matmul).
    x_flat = x.reshape(x.shape[0], -1)
    h_ref = jnp.maximum(x_flat @ conv_w.reshape(8, -1).T + conv_b, 0.0)
    ref = jax.nn.sigmoid(h_ref @ lin_w.T + lin_b)
    assert out.shape == (x.shape[0], 1)
    # The kernel uses the EUP approximate reciprocal for the sigmoid denominator,
    # so allow ~1e-3 absolute error vs the exact reference.
    assert jnp.allclose(out, ref, atol=2e-3, rtol=0.0), (out, ref)

    print("KERNEL_OK")
</pallas_src>

<mosaic_0001>
module attributes {stable_mosaic.version = 11 : i64} {
  func.func @_simple_model_kernel(%arg0: i32, %arg1: memref<8x300xf32, #tpu.memory_space<vmem>>, %arg2: memref<300x8xf32, #tpu.memory_space<vmem>>, %arg3: memref<2x8xf32, #tpu.memory_space<vmem>>, %arg4: memref<1xf32, #tpu.memory_space<smem>>, %arg5: memref<1x1x8xf32, #tpu.memory_space<vmem>>) attributes {dimension_semantics = [#tpu.dimension_semantics<parallel>], iteration_bounds = array<i64: 1>, scalar_prefetch = 0 : i64, scratch_operands = 0 : i64, tpu.core_type = #tpu.core_type<tc>, window_params = [{transform_indices = @transform_0, window_bounds = array<i64: 8, 300>}, {pipeline_mode = #tpu.pipeline_mode<synchronous>, transform_indices = @transform_1, window_bounds = array<i64: 300, 8>}, {pipeline_mode = #tpu.pipeline_mode<synchronous>, transform_indices = @transform_2, window_bounds = array<i64: 2, 8>}, {transform_indices = @transform_3, window_bounds = array<i64: 1>}, {transform_indices = @transform_4, window_bounds = array<i64: 1, 1, 8>}]} {
    %c0 = arith.constant 0 : index
    %c0_0 = arith.constant 0 : index
    %0 = vector.load %arg1[%c0, %c0_0] : memref<8x300xf32, #tpu.memory_space<vmem>>, vector<8x300xf32>
    %c0_1 = arith.constant 0 : index
    %c0_2 = arith.constant 0 : index
    %1 = vector.load %arg3[%c0_1, %c0_2] : memref<2x8xf32, #tpu.memory_space<vmem>>, vector<1x8xf32>
    %c1 = arith.constant 1 : index
    %c0_3 = arith.constant 0 : index
    %2 = vector.load %arg3[%c1, %c0_3] : memref<2x8xf32, #tpu.memory_space<vmem>>, vector<1x8xf32>
    %c0_4 = arith.constant 0 : index
    %c0_5 = arith.constant 0 : index
    %3 = vector.load %arg2[%c0_4, %c0_5] : memref<300x8xf32, #tpu.memory_space<vmem>>, vector<300x8xf32>
    %cst = arith.constant dense<0.000000e+00> : vector<8x8xf32>
    %4 = tpu.matmul %0, %3, %cst {dimension_numbers = #tpu.dot_dimension_numbers<[1], [0], [0], [1], [0, 0, 1, 1], [], []>} : vector<8x300xf32>, vector<300x8xf32>, vector<8x8xf32> -> vector<8x8xf32>
    %5 = vector.broadcast %1 : vector<1x8xf32> to vector<8x8xf32>
    %6 = arith.addf %4, %5 : vector<8x8xf32>
    %cst_6 = arith.constant 0.000000e+00 : f32
    %7 = vector.broadcast %cst_6 : f32 to vector<8x8xf32>
    %8 = arith.maximumf %6, %7 : vector<8x8xf32>
    %9 = vector.broadcast %2 : vector<1x8xf32> to vector<8x8xf32>
    %10 = arith.mulf %8, %9 : vector<8x8xf32>
    %cst_7 = arith.constant dense<0.000000e+00> : vector<8xf32>
    %11 = vector.multi_reduction <add>, %10, %cst_7 [1] : vector<8x8xf32> to vector<8xf32>
    %c0_8 = arith.constant 0 : index
    %12 = memref.load %arg4[%c0_8] : memref<1xf32, #tpu.memory_space<smem>>
    %13 = vector.broadcast %12 : f32 to vector<8xf32>
    %14 = arith.addf %11, %13 : vector<8xf32>
    %cst_9 = arith.constant 0.000000e+00 : f32
    %15 = vector.broadcast %cst_9 : f32 to vector<8xf32>
    %16 = arith.subf %15, %14 : vector<8xf32>
    %17 = math.exp %16 : vector<8xf32>
    %cst_10 = arith.constant 1.000000e+00 : f32
    %18 = vector.broadcast %cst_10 : f32 to vector<8xf32>
    %19 = arith.addf %18, %17 : vector<8xf32>
    %20 = tpu.reciprocal %19 {approx = true} : vector<8xf32> -> vector<8xf32>
    %21 = vector.shape_cast %20 : vector<8xf32> to vector<1x1x8xf32>
    %c0_11 = arith.constant 0 : index
    %c0_12 = arith.constant 0 : index
    %c0_13 = arith.constant 0 : index
    %22 = vector.load %arg5[%c0_11, %c0_12, %c0_13] : memref<1x1x8xf32, #tpu.memory_space<vmem>>, vector<1x1x8xf32>
    tpu.vector_store %arg5[%c0_11, %c0_12, %c0_13], %21 {strides = array<i32>} : memref<1x1x8xf32, #tpu.memory_space<vmem>>, vector<1x1x8xf32>,
    return
  }
  func.func @transform_0(%arg0: i32) -> (i32, i32) {
    %c0_i32 = arith.constant 0 : i32
    %c0_i32_0 = arith.constant 0 : i32
    return %arg0, %c0_i32 : i32, i32
  }
  func.func @transform_1(%arg0: i32) -> (i32, i32) {
    %c0_i32 = arith.constant 0 : i32
    %c0_i32_0 = arith.constant 0 : i32
    %c0_i32_1 = arith.constant 0 : i32
    return %c0_i32, %c0_i32_0 : i32, i32
  }
  func.func @transform_2(%arg0: i32) -> (i32, i32) {
    %c0_i32 = arith.constant 0 : i32
    %c0_i32_0 = arith.constant 0 : i32
    %c0_i32_1 = arith.constant 0 : i32
    return %c0_i32, %c0_i32_0 : i32, i32
  }
  func.func @transform_3(%arg0: i32) -> i32 {
    %c0_i32 = arith.constant 0 : i32
    %c0_i32_0 = arith.constant 0 : i32
    return %c0_i32 : i32
  }
  func.func @transform_4(%arg0: i32) -> (i32, i32, i32) {
    %c0_i32 = arith.constant 0 : i32
    %c0_i32_0 = arith.constant 0 : i32
    %c0_i32_1 = arith.constant 0 : i32
    return %arg0, %c0_i32, %c0_i32_0 : i32, i32, i32
  }
}

</mosaic_0001>

<llo_original>
// kernel: tpu_custom_call.1
$region0: #{tpu_custom_call.1}
  #allocation0 [shape = 'u32[]', space=smem, size = 0x4, offset = 0x4, fixed_abs, tag = 'smem constant byte address 0x4 - core index']
  #allocation1 [shape = 'u32[72,128]{1,0:T(1,128)}', space=vmem, size = 0x9000, scoped, tag = 'internal scratch']
  #allocation2 [shape = 'f32[1]{0:T(128)S(6)}', space=smem, size = 0x200, scoped, tag = 'scoped memory for tpu_custom_call.1']
  %s0 = inlined_call_operand.vmem [shape: f32[8,300], index: 0, kind: input, shape index: {}]
  %s1 = inlined_call_operand.vmem [shape: f32[300,8], index: 1, kind: input, shape index: {}]
  %s2 = inlined_call_operand.vmem [shape: f32[2,8], index: 2, kind: input, shape index: {}]
  %s3 = inlined_call_operand.<no memory space> [shape: f32[1], index: 3, kind: input, shape index: {}]
  %s4 = inlined_call_operand.hbm [shape: f32[1,1,8], index: 4, kind: output, shape index: {}]
  %s5 = sld [smem:[#allocation0]]
  $region26: #{tpu_custom_call.1} parent=0
    _
  %s7 = ssub.s32 1, %s5
  %s8 = scalar_select 0, %s7, %s5
  %9 = sst [smem:[#allocation2]] %s3
  $region1: #{tpu_custom_call.1} parent=0
    #allocation3 [shape = 'u8[512]{0}', space=vmem, size = 0x400, scoped, tag = 'output window, operand 0, single buffered']
    #allocation4 [shape = 's32[1]{0}', space=sflag, size = 0x4, scoped, tag = 'scoped memory for tpu_custom_call.1']
    %10 = vsyncpa [#allocation4], 0
    // Predicated region
    $region2: #{tpu_custom_call.1} parent=1 // pred_check
      _
    $region3: #{tpu_custom_call.1} parent=1 // pred_check_branch
      %12 = sbr.rel (0) target = $region5
    $region4: #{tpu_custom_call.1} parent=1 // pred_region
      _
    $region5: #{tpu_custom_call.1} parent=1 // pred_fallthru
      _
    // Predicated region
    $region6: #{tpu_custom_call.1} parent=1 // pred_check
      _
    $region7: #{tpu_custom_call.1} parent=1 // pred_check_branch
      %14 = sbr.rel (0) target = $region9
    $region8: #{tpu_custom_call.1} parent=1 // pred_region
      _
    $region9: #{tpu_custom_call.1} parent=1 // pred_fallthru
      _
    // Predicated region
    $region10: #{tpu_custom_call.1} parent=1 // pred_check
      _
    $region11: #{tpu_custom_call.1} parent=1 // pred_check_branch
      %16 = sbr.rel (0) target = $region13
    $region12: #{tpu_custom_call.1} parent=1 // pred_region
      _
    $region13: #{tpu_custom_call.1} parent=1 // pred_fallthru
      _
    // Predicated region
    $region14: #{tpu_custom_call.1} parent=1 // pred_check
      _
    $region15: #{tpu_custom_call.1} parent=1 // pred_check_branch
      %18 = sbr.rel (0) target = $region17
    $region16: #{tpu_custom_call.1} parent=1 // pred_region
      _
    $region17: #{tpu_custom_call.1} parent=1 // pred_fallthru
      _
    %v19 = vld [vmem:[%s0] sm:$0xff]
    %v20 = vld [vmem:[%s0 + $0x8] sm:$0xff]
    %v21 = vld [vmem:[%s0 + $0x10] sm:$0xff]
    %v22 = vld [vmem:[%s2] sm:$0x1]
    %v23 = vld [vmem:[%s2 + $0x1] sm:$0x1]
    %v24 = vld [vmem:[%s1] sm:$0xff]
    %v25 = vld [vmem:[%s1 + $0x8] sm:$0xff]
    %v26 = vld [vmem:[%s1 + $0x10] sm:$0xff]
    %v27 = vld [vmem:[%s1 + $0x18] sm:$0xff]
    %v28 = vld [vmem:[%s1 + $0x20] sm:$0xff]
    %v29 = vld [vmem:[%s1 + $0x28] sm:$0xff]
    %v30 = vld [vmem:[%s1 + $0x30] sm:$0xff]
    %v31 = vld [vmem:[%s1 + $0x38] sm:$0xff]
    %v32 = vld [vmem:[%s1 + $0x40] sm:$0xff]
    %v33 = vld [vmem:[%s1 + $0x48] sm:$0xff]
    %v34 = vld [vmem:[%s1 + $0x50] sm:$0xff]
    %v35 = vld [vmem:[%s1 + $0x58] sm:$0xff]
    %v36 = vld [vmem:[%s1 + $0x60] sm:$0xff]
    %v37 = vld [vmem:[%s1 + $0x68] sm:$0xff]
    %v38 = vld [vmem:[%s1 + $0x70] sm:$0xff]
    %v39 = vld [vmem:[%s1 + $0x78] sm:$0xff]
    %v40 = vld [vmem:[%s1 + $0x80] sm:$0xff]
    %v41 = vld [vmem:[%s1 + $0x88] sm:$0xff]
    %v42 = vld [vmem:[%s1 + $0x90] sm:$0xff]
    %v43 = vld [vmem:[%s1 + $0x98] sm:$0xff]
    %v44 = vld [vmem:[%s1 + $0xa0] sm:$0xff]
    %v45 = vld [vmem:[%s1 + $0xa8] sm:$0xff]
    %v46 = vld [vmem:[%s1 + $0xb0] sm:$0xff]
    %v47 = vld [vmem:[%s1 + $0xb8] sm:$0xff]
    %v48 = vld [vmem:[%s1 + $0xc0] sm:$0xff]
    %v49 = vld [vmem:[%s1 + $0xc8] sm:$0xff]
    %v50 = vld [vmem:[%s1 + $0xd0] sm:$0xff]
    %v51 = vld [vmem:[%s1 + $0xd8] sm:$0xff]
    %v52 = vld [vmem:[%s1 + $0xe0] sm:$0xff]
    %v53 = vld [vmem:[%s1 + $0xe8] sm:$0xff]
    %v54 = vld [vmem:[%s1 + $0xf0] sm:$0xff]
    %v55 = vld [vmem:[%s1 + $0xf8] sm:$0xff]
    %v56 = vld [vmem:[%s1 + $0x100] sm:$0xff]
    %v57 = vld [vmem:[%s1 + $0x108] sm:$0xff]
    %v58 = vld [vmem:[%s1 + $0x110] sm:$0xff]
    %v59 = vld [vmem:[%s1 + $0x118] sm:$0xff]
    %v60 = vld [vmem:[%s1 + $0x120] sm:$0xff]
    %v61 = vld [vmem:[%s1 + $0x128] sm:$0xf]
    %v62 = vperm.slane %v22, 0
    %vm63 = vcmask 359424
    %v65 = vsel %vm63, %v21, 0
    %vm67 = vcmask 1043456
    %v69 = vsel %vm67, %v61, 0
    %71 = vmatpush.msra.mxu0 %v39
    %72 = vmatpush.msra.mxu0 %v38
    %73 = vmatpush.msra.mxu0 %v37
    %74 = vmatpush.msra.mxu0 %v36
    %75 = vmatpush.msra.mxu0 %v35
    %76 = vmatpush.msra.mxu0 %v34
    %77 = vmatpush.msra.mxu0 %v33
    %78 = vmatpush.msra.mxu0 %v32
    %79 = vmatpush.msra.mxu0 %v31
    %80 = vmatpush.msra.mxu0 %v30
    %81 = vmatpush.msra.mxu0 %v29
    %82 = vmatpush.msra.mxu0 %v28
    %83 = vmatpush.msra.mxu0 %v27
    %84 = vmatpush.msra.mxu0 %v26
    %85 = vmatpush.msra.mxu0 %v25
    %86 = vmatpush.msra.mxu0 %v24
    %87 = vmatmul.f32.gmra.mxu0 %v19
    %v88 = vpop.f32.mrf.mxu0
    %v89 = vadd.f32 %v62, %v88
    %90 = vdwg.mxu0
    %91 = vmatpush.msra.mxu0 %v55
    %92 = vmatpush.msra.mxu0 %v54
    %93 = vmatpush.msra.mxu0 %v53
    %94 = vmatpush.msra.mxu0 %v52
    %95 = vmatpush.msra.mxu0 %v51
    %96 = vmatpush.msra.mxu0 %v50
    %97 = vmatpush.msra.mxu0 %v49
    %98 = vmatpush.msra.mxu0 %v48
    %99 = vmatpush.msra.mxu0 %v47
    %100 = vmatpush.msra.mxu0 %v46
    %101 = vmatpush.msra.mxu0 %v45
    %102 = vmatpush.msra.mxu0 %v44
    %103 = vmatpush.msra.mxu0 %v43
    %104 = vmatpush.msra.mxu0 %v42
    %105 = vmatpush.msra.mxu0 %v41
    %106 = vmatpush.msra.mxu0 %v40
    %107 = vmatmul.f32.gmra.mxu0 %v20
    %v108 = vpop.f32.mrf.mxu0
    %v109 = vadd.f32 %v89, %v108
    %110 = vdwg.mxu0
    %111 = vmatpush.msra.mxu0 0.0
    %112 = vmatpush.msra.mxu0 0.0
    %113 = vmatpush.msra.mxu0 0.0
    %114 = vmatpush.msra.mxu0 0.0
    %115 = vmatpush.msra.mxu0 0.0
    %116 = vmatpush.msra.mxu0 0.0
    %117 = vmatpush.msra.mxu0 0.0
    %118 = vmatpush.msra.mxu0 0.0
    %119 = vmatpush.msra.mxu0 0.0
    %120 = vmatpush.msra.mxu0 0.0
    %121 = vmatpush.msra.mxu0 %v69
    %122 = vmatpush.msra.mxu0 %v60
    %123 = vmatpush.msra.mxu0 %v59
    %124 = vmatpush.msra.mxu0 %v58
    %125 = vmatpush.msra.mxu0 %v57
    %126 = vmatpush.msra.mxu0 %v56
    %127 = vmatmul.f32.gmra.mxu0 %v65
    %v128 = vpop.f32.mrf.mxu0
    %v129 = vadd.f32 %v109, %v128
    %130 = vdwg.mxu0
    %v131 = vmax.f32 %v129, 0.0
    %v132 = vperm.slane %v23, 0
    %v133 = vmul.f32 %v131, %v132
    %vm134 = vcmask 64512
    %v135 = vsel %vm134, %v133, 0.0
    %136 = vadd.xlane.f32.xlu0 %v135
    %v137 = vpop.xlane.xlu0 %136
    %s138 = sld [smem:[#allocation2]]
    %v139 = vstv %s138
    %v140 = vadd.f32 %v137, %v139
    %v141 = vsub.f32 0.0, %v140
    %v142 = vmul.f32 %v141, 1.442695
    %v143 = vpow.pop %v142
    %v144 = vadd.f32 %v143, 1.0
    %v145 = vrcp.pop %v144
    %v147 = vlaneseq
    %v148 = vand.u32 %v147, 127
    %v149 = vperm.slane %v145, %v148
    %vm151 = vcmask 57344
    %152 = vst.msk [vmem:[#allocation3] sm:$0x1] %vm151, %v149
    // Predicated region
    $region18: #{tpu_custom_call.1} parent=1 // pred_check
      _
    $region19: #{tpu_custom_call.1} parent=1 // pred_check_branch
      %154 = sbr.rel (0) target = $region21
    $region20: #{tpu_custom_call.1} parent=1 // pred_region
      %156 = vsyncadd [#allocation4], 0
      %s158 = sshll.u32 [#allocation3], 4
      %s159 = int_to_ptr.vmem [resolvable:$true] %s158
      %s160 = sshll.u32 %s4, 4
      %s161 = int_to_ptr.hbm [resolvable:$true] %s160
      %163 = dma.vmem_to_hbm [thread:$0]  %s159, 16, %s161, [#allocation4]
    $region21: #{tpu_custom_call.1} parent=1 // pred_fallthru
      _
    // Predicated region
    $region22: #{tpu_custom_call.1} parent=1 // pred_check
      _
    $region23: #{tpu_custom_call.1} parent=1 // pred_check_branch
      %165 = sbr.rel (0) target = $region25
    $region24: #{tpu_custom_call.1} parent=1 // pred_region
      %167 = dma.done [#allocation4], 16
    $region25: #{tpu_custom_call.1} parent=1 // pred_fallthru
      _
    %168 = vsyncpa [#allocation4], 1

</llo_original>
